<compile_context>
chip_gen: v5e
topology: v5e:2x2
jax: 0.10.0
libtpu: 0.0.40
codegen_flags: <defaults>
</compile_context>

<pallas_src>
import jax
import jax.numpy as jnp
from jax.experimental import pallas as pl
from jax.experimental.pallas import tpu as pltpu

LANES = 128            # vreg lane width (last dim)
SUBLANES = 8           # f32 sublane packing (second-to-last dim)
MAX_BLOCK_ROWS = 4096  # (4096, 128) f32 = 2 MiB/buffer; 8 MiB total double-buffered
PALLAS_MIN_ELEMENTS = 1 << 16  # below this, fused XLA affine beats kernel launch cost


def _round_up(a: int, b: int) -> int:
    return ((a + b - 1) // b) * b


def linear_kernel(params_ref, x_ref, o_ref):
    # params_ref: (2,) in SMEM -> [w00, b0]
    # x_ref / o_ref: (block_rows, 128) lane-dense f32 tiles in VMEM.
    w = params_ref[0]
    b = params_ref[1]
    o_ref[...] = x_ref[...] * w + b  # VPU scalar-affine; HBM-bound.


def linear_regression_forward(x, weight, bias, *, max_block_rows=MAX_BLOCK_ROWS,
                              force_pallas=False):
    """nn.Linear(1, 1) forward: (N, 1) -> (N, 1)."""
    n, f = x.shape
    assert f == 1 and weight.shape == (1, 1) and bias.shape == (1,)
    # Tiling constants below (SUBLANES=8, pad-to-128 lanes) are f32-specific.
    assert x.dtype == jnp.float32, "kernel assumes f32 (8,128) packing"

    w = weight.reshape(()).astype(x.dtype)
    b = bias.reshape(()).astype(x.dtype)

    # Small-N fast path: launch + wrapper overhead dominates for tiny inputs
    # (the module's actual N=50 workload); a single fused XLA op wins.
    if n < PALLAS_MIN_ELEMENTS and not force_pallas:
        return x * w + b

    # Pack the two scalar parameters into one SMEM vector.
    params = jnp.stack([w, b])

    # Lane-dense slab: view the N scalars as (rows, 128).
    rows = pl.cdiv(n, LANES)
    padded = rows * LANES
    flat = x.reshape(-1)                      # (N,1) -> (N,): metadata only
    if padded != n:
        # Ragged lane tail only: pad up to the next multiple of 128.  With
        # allow_input_fusion XLA may fold this into the kernel's input DMA.
        flat = jnp.pad(flat, (0, padded - n))
    slab = flat.reshape(rows, LANES)          # bitcast when padded == n

    # Tile sizing: big tiles to amortize per-step overhead, but cap at ~rows/2
    # so the grid has >= 2 steps and both v7x TensorCores get work.  Ragged
    # last block along rows is handled by Pallas masking (no padding needed).
    mbr = _round_up(max(int(max_block_rows), SUBLANES), SUBLANES)
    target = max(SUBLANES, _round_up(pl.cdiv(rows, 2), SUBLANES))
    block_rows = min(mbr, target)
    if block_rows >= rows:
        block_rows = rows                     # single full-extent block (always legal)
    grid = (pl.cdiv(rows, block_rows),)

    out_slab = pl.pallas_call(
        linear_kernel,
        out_shape=jax.ShapeDtypeStruct((rows, LANES), x.dtype),
        grid=grid,
        in_specs=[
            # Scalar params: whole (2,) array resident in SMEM.
            pl.BlockSpec(memory_space=pltpu.MemorySpace.SMEM),
            # Lane-dense input tiles, double-buffered by the Pallas pipeline.
            pl.BlockSpec((block_rows, LANES), lambda i: (i, 0)),
        ],
        out_specs=pl.BlockSpec((block_rows, LANES), lambda i: (i, 0)),
        compiler_params=pltpu.CompilerParams(
            # Independent tiles: shard the grid across both TCs on v7x.
            dimension_semantics=("parallel",),
            # Let XLA fuse the (cheap) pad/reshape producer into the input DMA.
            allow_input_fusion=[False, True],
        ),
        cost_estimate=pl.CostEstimate(
            flops=2 * padded,
            transcendentals=0,
            bytes_accessed=2 * padded * 4 + 8,
        ),
    )(params, slab)

    out_flat = out_slab.reshape(-1)
    if padded != n:
        out_flat = out_flat[:n]               # only for ragged N
    return out_flat.reshape(n, 1)


if __name__ == "__main__":
    # Deterministic parameter init mimicking nn.Linear(1, 1):
    # U(-1/sqrt(fan_in), 1/sqrt(fan_in)) with fan_in = 1 -> U(-1, 1).
    key = jax.random.PRNGKey(0)
    kw, kb = jax.random.split(key)
    weight = jax.random.uniform(kw, (1, 1), jnp.float32, minval=-1.0, maxval=1.0)
    bias = jax.random.uniform(kb, (1,), jnp.float32, minval=-1.0, maxval=1.0)

    # Same input the reference script builds: linspace(-1, 1, 50) -> (50, 1).
    x = jnp.expand_dims(jnp.linspace(-1.0, 1.0, 50, dtype=jnp.float32), axis=1)
    ref = x @ weight.T + bias

    # Default path for the module's actual workload: small-N fused-XLA bypass.
    out_fast = jax.block_until_ready(linear_regression_forward(x, weight, bias))
    assert out_fast.shape == (50, 1)
    assert jnp.allclose(out_fast, ref, atol=1e-6), "fast path mismatch (N=50)"

    # Force the Pallas kernel on the same input (ragged-N path, single block).
    out_pl = jax.block_until_ready(
        linear_regression_forward(x, weight, bias, force_pallas=True)
    )
    assert out_pl.shape == (50, 1)
    assert jnp.allclose(out_pl, ref, atol=1e-6), "pallas mismatch (N=50)"

    # Aligned zero-copy path with a multi-step grid (4096 % 128 == 0 -> no pad).
    x2 = jax.random.normal(jax.random.PRNGKey(1), (4096, 1), dtype=jnp.float32)
    ref2 = x2 @ weight.T + bias
    out2 = jax.block_until_ready(
        linear_regression_forward(x2, weight, bias, force_pallas=True)
    )
    assert out2.shape == (4096, 1)
    assert jnp.allclose(out2, ref2, atol=1e-6), "pallas mismatch (N=4096, aligned)"

    # Ragged path with a multi-step grid and masked last block (3000 % 128 != 0).
    x3 = jax.random.normal(jax.random.PRNGKey(2), (3000, 1), dtype=jnp.float32)
    ref3 = x3 @ weight.T + bias
    out3 = jax.block_until_ready(
        linear_regression_forward(x3, weight, bias, force_pallas=True)
    )
    assert out3.shape == (3000, 1)
    assert jnp.allclose(out3, ref3, atol=1e-6), "pallas mismatch (N=3000, ragged)"

    print("KERNEL_OK")
</pallas_src>

<mosaic_0001>
module attributes {stable_mosaic.version = 11 : i64} {
  func.func @linear_kernel(%arg0: i32, %arg1: memref<2xf32, #tpu.memory_space<smem>>, %arg2: memref<1x128xf32, #tpu.memory_space<vmem>>, %arg3: memref<1x128xf32, #tpu.memory_space<vmem>>) attributes {dimension_semantics = [#tpu.dimension_semantics<parallel>], iteration_bounds = array<i64: 1>, scalar_prefetch = 0 : i64, scratch_operands = 0 : i64, tpu.core_type = #tpu.core_type<tc>, window_params = [{transform_indices = @transform_0, window_bounds = array<i64: 2>}, {transform_indices = @transform_1, window_bounds = array<i64: 1, 128>}, {transform_indices = @transform_2, window_bounds = array<i64: 1, 128>}]} {
    %c0 = arith.constant 0 : index
    %0 = memref.load %arg1[%c0] : memref<2xf32, #tpu.memory_space<smem>>
    %c1 = arith.constant 1 : index
    %1 = memref.load %arg1[%c1] : memref<2xf32, #tpu.memory_space<smem>>
    %c0_0 = arith.constant 0 : index
    %c0_1 = arith.constant 0 : index
    %2 = vector.load %arg2[%c0_0, %c0_1] : memref<1x128xf32, #tpu.memory_space<vmem>>, vector<1x128xf32>
    %3 = vector.broadcast %0 : f32 to vector<1x128xf32>
    %4 = arith.mulf %2, %3 : vector<1x128xf32>
    %5 = vector.broadcast %1 : f32 to vector<1x128xf32>
    %6 = arith.addf %4, %5 : vector<1x128xf32>
    %c0_2 = arith.constant 0 : index
    %c0_3 = arith.constant 0 : index
    %7 = vector.load %arg3[%c0_2, %c0_3] : memref<1x128xf32, #tpu.memory_space<vmem>>, vector<1x128xf32>
    tpu.vector_store %arg3[%c0_2, %c0_3], %6 {strides = array<i32>} : memref<1x128xf32, #tpu.memory_space<vmem>>, vector<1x128xf32>,
    return
  }
  func.func @transform_0(%arg0: i32) -> i32 {
    %c0_i32 = arith.constant 0 : i32
    %c0_i32_0 = arith.constant 0 : i32
    return %c0_i32 : i32
  }
  func.func @transform_1(%arg0: i32) -> (i32, i32) {
    %c0_i32 = arith.constant 0 : i32
    %c0_i32_0 = arith.constant 0 : i32
    return %arg0, %c0_i32 : i32, i32
  }
  func.func @transform_2(%arg0: i32) -> (i32, i32) {
    %c0_i32 = arith.constant 0 : i32
    %c0_i32_0 = arith.constant 0 : i32
    return %arg0, %c0_i32 : i32, i32
  }
}

</mosaic_0001>

<llo_original>
// kernel: tpu_custom_call.1
$region0: #{tpu_custom_call.1}
  #allocation0 [shape = 'u32[]', space=smem, size = 0x4, offset = 0x4, fixed_abs, tag = 'smem constant byte address 0x4 - core index']
  #allocation1 [shape = 'u32[72,128]{1,0:T(1,128)}', space=vmem, size = 0x9000, scoped, tag = 'internal scratch']
  %s0 = inlined_call_operand.hbm [shape: f32[2], index: 0, kind: input, shape index: {}]
  %s1 = inlined_call_operand.hbm [shape: f32[1,128], index: 1, kind: input, shape index: {}]
  %s2 = inlined_call_operand.hbm [shape: f32[1,128], index: 2, kind: output, shape index: {}]
  %s3 = sld [smem:[#allocation0]]
  $region26: #{tpu_custom_call.1} parent=0
    _
  %s5 = ssub.s32 1, %s3
  %s6 = scalar_select 0, %s5, %s3
  $region1: #{tpu_custom_call.1} parent=0
    #allocation2 [shape = 'u8[512]{0}', space=smem, size = 0x200, scoped, tag = 'input window, operand 0, single buffered']
    #allocation3 [shape = 's32[1]{0}', space=sflag, size = 0x4, scoped, tag = 'scoped memory for tpu_custom_call.1']
    #allocation4 [shape = 's32[1]{0}', space=sflag, size = 0x4, scoped, tag = 'scoped memory for tpu_custom_call.1']
    #allocation5 [shape = 's32[1]{0}', space=sflag, size = 0x4, scoped, tag = 'scoped memory for tpu_custom_call.1']
    #allocation6 [shape = 'u8[512]{0}', space=vmem, size = 0x400, scoped, tag = 'input window, operand 1, single buffered']
    #allocation7 [shape = 'u8[512]{0}', space=vmem, size = 0x400, scoped, tag = 'output window, operand 0, single buffered']
    %7 = vsyncpa [#allocation5], 0
    %8 = vsyncpa [#allocation3], 0
    %9 = vsyncpa [#allocation4], 0
    // Predicated region
    $region2: #{tpu_custom_call.1} parent=1 // pred_check
      _
    $region3: #{tpu_custom_call.1} parent=1 // pred_check_branch
      %11 = sbr.rel (0) target = $region5
    $region4: #{tpu_custom_call.1} parent=1 // pred_region
      %13 = vsyncadd [#allocation5], 0
      %s15 = sshll.u32 %s0, 4
      %s16 = int_to_ptr.hbm [resolvable:$true] %s15
      %18 = dma.hbm_to_smem %s16, 16, [#allocation2], [#allocation5]
    $region5: #{tpu_custom_call.1} parent=1 // pred_fallthru
      _
    // Predicated region
    $region6: #{tpu_custom_call.1} parent=1 // pred_check
      _
    $region7: #{tpu_custom_call.1} parent=1 // pred_check_branch
      %20 = sbr.rel (0) target = $region9
    $region8: #{tpu_custom_call.1} parent=1 // pred_region
      %22 = vsyncadd [#allocation3], 0
      %s24 = sshll.u32 %s1, 4
      %s25 = int_to_ptr.hbm [resolvable:$true] %s24
      %s26 = sshll.u32 [#allocation6], 4
      %s27 = int_to_ptr.vmem [resolvable:$true] %s26
      %29 = dma.hbm_to_vmem [thread:$0]  %s25, 16, %s27, [#allocation3]
    $region9: #{tpu_custom_call.1} parent=1 // pred_fallthru
      _
    // Predicated region
    $region10: #{tpu_custom_call.1} parent=1 // pred_check
      _
    $region11: #{tpu_custom_call.1} parent=1 // pred_check_branch
      %31 = sbr.rel (0) target = $region13
    $region12: #{tpu_custom_call.1} parent=1 // pred_region
      %33 = dma.done [#allocation5], 16
    $region13: #{tpu_custom_call.1} parent=1 // pred_fallthru
      _
    // Predicated region
    $region14: #{tpu_custom_call.1} parent=1 // pred_check
      _
    $region15: #{tpu_custom_call.1} parent=1 // pred_check_branch
      %35 = sbr.rel (0) target = $region17
    $region16: #{tpu_custom_call.1} parent=1 // pred_region
      %37 = dma.done [#allocation3], 16
    $region17: #{tpu_custom_call.1} parent=1 // pred_fallthru
      _
    %38 = sfence
    %s39 = sld [smem:[#allocation2]]
    %s40 = sld [smem:[#allocation2 + $0x1]]
    %v41 = vld [vmem:[#allocation6] sm:$0x1]
    %v42 = vstv %s39
    %v43 = vmul.f32 %v41, %v42
    %v44 = vstv %s40
    %v45 = vadd.f32 %v43, %v44
    %46 = vst [vmem:[#allocation7] sm:$0x1] %v45
    // Predicated region
    $region18: #{tpu_custom_call.1} parent=1 // pred_check
      _
    $region19: #{tpu_custom_call.1} parent=1 // pred_check_branch
      %48 = sbr.rel (0) target = $region21
    $region20: #{tpu_custom_call.1} parent=1 // pred_region
      %50 = vsyncadd [#allocation4], 0
      %s52 = sshll.u32 [#allocation7], 4
      %s53 = int_to_ptr.vmem [resolvable:$true] %s52
      %s54 = sshll.u32 %s2, 4
      %s55 = int_to_ptr.hbm [resolvable:$true] %s54
      %57 = dma.vmem_to_hbm [thread:$0]  %s53, 16, %s55, [#allocation4]
    $region21: #{tpu_custom_call.1} parent=1 // pred_fallthru
      _
    // Predicated region
    $region22: #{tpu_custom_call.1} parent=1 // pred_check
      _
    $region23: #{tpu_custom_call.1} parent=1 // pred_check_branch
      %59 = sbr.rel (0) target = $region25
    $region24: #{tpu_custom_call.1} parent=1 // pred_region
      %61 = dma.done [#allocation4], 16
    $region25: #{tpu_custom_call.1} parent=1 // pred_fallthru
      _
    %62 = vsyncpa [#allocation3], 1
    %63 = vsyncpa [#allocation4], 1
    %64 = vsyncpa [#allocation5], 1

</llo_original>
